<compile_context>
chip_gen: v6e
topology: v6e:2x2x1
jax: 0.10.0
libtpu: 0.0.40
codegen_flags: <defaults>
</compile_context>

<pallas_src>
import jax
import jax.numpy as jnp
from jax.experimental import pallas as pl
from jax.experimental.pallas import tpu as pltpu


def _round_up(n, m):
    return ((n + m - 1) // m) * m


def _rlhf_kernel(x_ref, w1_ref, b1_ref, w2_ref, b2_ref, o_ref):
    # x_ref:  (TB, D)  input dtype   w1_ref: (D, H) bf16   b1_ref: (1, H) f32
    # w2_ref: (H, O)   bf16          b2_ref: (1, O) f32    o_ref:  (TB, O) f32
    x = x_ref[...].astype(jnp.bfloat16)               # in-VMEM cast, VPU
    # Linear 1 on the MXU (bf16 inputs, f32 accumulation) + bias + ReLU in f32.
    h = jnp.dot(x, w1_ref[...], preferred_element_type=jnp.float32)
    h = jnp.maximum(h + b1_ref[...], 0.0)
    # Linear 2 on the MXU (bf16 inputs, f32 accumulation) + bias + Sigmoid in f32.
    y = jnp.dot(h.astype(jnp.bfloat16), w2_ref[...],
                preferred_element_type=jnp.float32)
    y = jax.nn.sigmoid(y + b2_ref[...])
    o_ref[...] = y.astype(o_ref.dtype)


def rlhf_forward(x, w1, b1, w2, b2, *, tb=4096):
    """x: [B, ...] flattened to [B, input_size]; returns [B, output_size] f32.

    Weights are stored [in_features, out_features] (transpose of PyTorch's
    [out, in]) so the kernel does plain row-major x @ W matmuls on the MXU.
    """
    B = x.shape[0]
    x2d = x.reshape(B, -1)
    D = x2d.shape[1]
    H = w1.shape[1]
    O = w2.shape[1]

    # Batch tiling: sublane-align the tile; keep >= 2 grid tiles when the batch
    # allows so the "parallel" batch axis can shard across both v7x TCs.
    B8 = _round_up(B, 8)
    tb_eff = min(_round_up(tb, 8), B8)
    if B8 >= 16:
        tb_eff = min(tb_eff, _round_up(pl.cdiv(B8, 2), 8))
    Bp = _round_up(B8, tb_eff)
    n_tiles = Bp // tb_eff

    # Only the batch dim is ever padded (rows sliced off below). Feature dims
    # D / H / O stay unpadded: block dims equal to the full array dim are legal
    # even when not multiples of (8, 128); the MXU pads internally.
    if Bp != B:
        xs = jnp.zeros((Bp, D), x2d.dtype).at[:B].set(x2d)
    else:
        xs = x2d

    w1b = w1.astype(jnp.bfloat16)                      # (D, H), KB-scale
    w2b = w2.astype(jnp.bfloat16)                      # (H, O)
    b1f = b1.reshape(1, H).astype(jnp.float32)
    b2f = b2.reshape(1, O).astype(jnp.float32)

    x_bytes = xs.dtype.itemsize
    cost = pl.CostEstimate(
        flops=2 * Bp * D * H + 2 * Bp * H * O,
        transcendentals=Bp * O,
        bytes_accessed=(Bp * D * x_bytes               # streamed x (dominant)
                        + D * H * 2 + H * O * 2        # resident bf16 weights
                        + H * 4 + O * 4                # f32 biases
                        + Bp * O * 4),                 # true-width f32 writeback
    )

    out = pl.pallas_call(
        _rlhf_kernel,
        out_shape=jax.ShapeDtypeStruct((Bp, O), jnp.float32),
        grid_spec=pltpu.PrefetchScalarGridSpec(
            num_scalar_prefetch=0,
            grid=(n_tiles,),
            in_specs=[
                pl.BlockSpec((tb_eff, D), lambda i: (i, 0)),   # streamed x tiles
                pl.BlockSpec((D, H), lambda i: (0, 0)),        # VMEM-resident weights
                pl.BlockSpec((1, H), lambda i: (0, 0)),
                pl.BlockSpec((H, O), lambda i: (0, 0)),
                pl.BlockSpec((1, O), lambda i: (0, 0)),
            ],
            out_specs=pl.BlockSpec((tb_eff, O), lambda i: (i, 0)),
        ),
        compiler_params=pltpu.CompilerParams(
            dimension_semantics=("parallel",),   # shard batch tiles across TCs (v7x)
        ),
        cost_estimate=cost,
    )(xs, w1b, b1f, w2b, b2f)

    return out[:B]


def init_params(key, input_size, hidden, output_size):
    # Mirrors PyTorch Linear's U(-1/sqrt(fan_in), 1/sqrt(fan_in)) init.
    k1, k2, k3, k4 = jax.random.split(key, 4)
    bound1 = 1.0 / jnp.sqrt(input_size)
    bound2 = 1.0 / jnp.sqrt(hidden)
    # stored as [in, out] (transpose of PyTorch's [out, in])
    w1 = jax.random.uniform(k1, (input_size, hidden), jnp.float32, -bound1, bound1)
    b1 = jax.random.uniform(k2, (hidden,), jnp.float32, -bound1, bound1)
    w2 = jax.random.uniform(k3, (hidden, output_size), jnp.float32, -bound2, bound2)
    b2 = jax.random.uniform(k4, (output_size,), jnp.float32, -bound2, bound2)
    return w1, b1, w2, b2


def _ref_bf16(x, w1, b1, w2, b2):
    # Pure-JAX reference using the same bf16-MXU-input / f32-accumulate path.
    x2d = x.reshape(x.shape[0], -1)
    h = jnp.maximum(
        jnp.dot(x2d.astype(jnp.bfloat16), w1.astype(jnp.bfloat16),
                preferred_element_type=jnp.float32) + b1.reshape(1, -1), 0.0)
    return jax.nn.sigmoid(
        jnp.dot(h.astype(jnp.bfloat16), w2.astype(jnp.bfloat16),
                preferred_element_type=jnp.float32) + b2.reshape(1, -1))


if __name__ == "__main__":
    key = jax.random.PRNGKey(0)
    kx, kp, kx2 = jax.random.split(key, 3)

    batch = 2
    input_size = 64      # flattened features
    hidden = 32          # fixed by the module definition
    output_size = 8

    x = jax.random.normal(kx, (batch, input_size), jnp.float32)
    w1, b1, w2, b2 = init_params(kp, input_size, hidden, output_size)

    y = rlhf_forward(x, w1, b1, w2, b2)
    jax.block_until_ready(y)
    assert y.shape == (batch, output_size)

    # Match the bf16-input / f32-accumulate reference tightly.
    y_ref = _ref_bf16(x, w1, b1, w2, b2)
    assert jnp.allclose(y, y_ref, atol=2e-3, rtol=2e-3)

    # Sanity vs full-f32 math (sigmoid output in [0,1], bf16 error is small).
    h_f32 = jnp.maximum(x @ w1 + b1.reshape(1, -1), 0.0)
    y_f32 = jax.nn.sigmoid(h_f32 @ w2 + b2.reshape(1, -1))
    assert jnp.allclose(y, y_f32, atol=2e-2, rtol=2e-2)

    # Exercise the multi-tile / ragged-batch path (B=40 -> padded to 48 rows,
    # 2 grid tiles, one per v7x TensorCore when sharded).
    x_big = jax.random.normal(kx2, (40, input_size), jnp.float32)
    y_big = rlhf_forward(x_big, w1, b1, w2, b2)
    jax.block_until_ready(y_big)
    assert y_big.shape == (40, output_size)
    assert jnp.allclose(y_big, _ref_bf16(x_big, w1, b1, w2, b2),
                        atol=2e-3, rtol=2e-3)

    print("KERNEL_OK")
</pallas_src>

<mosaic_0001>
module attributes {stable_mosaic.version = 11 : i64} {
  func.func @_rlhf_kernel(%arg0: i32, %arg1: memref<8x64xf32, #tpu.memory_space<vmem>>, %arg2: memref<64x32xbf16, #tpu.memory_space<vmem>>, %arg3: memref<1x32xf32, #tpu.memory_space<vmem>>, %arg4: memref<32x8xbf16, #tpu.memory_space<vmem>>, %arg5: memref<1x8xf32, #tpu.memory_space<vmem>>, %arg6: memref<8x8xf32, #tpu.memory_space<vmem>>) attributes {dimension_semantics = [#tpu.dimension_semantics<parallel>], iteration_bounds = array<i64: 1>, scalar_prefetch = 0 : i64, scratch_operands = 0 : i64, tpu.core_type = #tpu.core_type<tc>, window_params = [{transform_indices = @transform_0, window_bounds = array<i64: 8, 64>}, {pipeline_mode = #tpu.pipeline_mode<synchronous>, transform_indices = @transform_1, window_bounds = array<i64: 64, 32>}, {pipeline_mode = #tpu.pipeline_mode<synchronous>, transform_indices = @transform_2, window_bounds = array<i64: 1, 32>}, {pipeline_mode = #tpu.pipeline_mode<synchronous>, transform_indices = @transform_3, window_bounds = array<i64: 32, 8>}, {pipeline_mode = #tpu.pipeline_mode<synchronous>, transform_indices = @transform_4, window_bounds = array<i64: 1, 8>}, {transform_indices = @transform_5, window_bounds = array<i64: 8, 8>}]} {
    %c0 = arith.constant 0 : index
    %c0_0 = arith.constant 0 : index
    %0 = vector.load %arg1[%c0, %c0_0] : memref<8x64xf32, #tpu.memory_space<vmem>>, vector<8x64xf32>
    %1 = arith.truncf %0 : vector<8x64xf32> to vector<8x64xbf16>
    %c0_1 = arith.constant 0 : index
    %c0_2 = arith.constant 0 : index
    %2 = vector.load %arg2[%c0_1, %c0_2] : memref<64x32xbf16, #tpu.memory_space<vmem>>, vector<64x32xbf16>
    %cst = arith.constant dense<0.000000e+00> : vector<8x32xf32>
    %3 = tpu.matmul %1, %2, %cst {dimension_numbers = #tpu.dot_dimension_numbers<[1], [0], [0], [1], [0, 0, 1, 1], [], []>} : vector<8x64xbf16>, vector<64x32xbf16>, vector<8x32xf32> -> vector<8x32xf32>
    %c0_3 = arith.constant 0 : index
    %c0_4 = arith.constant 0 : index
    %4 = vector.load %arg3[%c0_3, %c0_4] : memref<1x32xf32, #tpu.memory_space<vmem>>, vector<1x32xf32>
    %5 = vector.broadcast %4 : vector<1x32xf32> to vector<8x32xf32>
    %6 = arith.addf %3, %5 : vector<8x32xf32>
    %cst_5 = arith.constant 0.000000e+00 : f32
    %7 = vector.broadcast %cst_5 : f32 to vector<8x32xf32>
    %8 = arith.maximumf %6, %7 : vector<8x32xf32>
    %9 = arith.truncf %8 : vector<8x32xf32> to vector<8x32xbf16>
    %c0_6 = arith.constant 0 : index
    %c0_7 = arith.constant 0 : index
    %10 = vector.load %arg4[%c0_6, %c0_7] : memref<32x8xbf16, #tpu.memory_space<vmem>>, vector<32x8xbf16>
    %cst_8 = arith.constant dense<0.000000e+00> : vector<8x8xf32>
    %11 = tpu.matmul %9, %10, %cst_8 {dimension_numbers = #tpu.dot_dimension_numbers<[1], [0], [0], [1], [0, 0, 1, 1], [], []>} : vector<8x32xbf16>, vector<32x8xbf16>, vector<8x8xf32> -> vector<8x8xf32>
    %c0_9 = arith.constant 0 : index
    %c0_10 = arith.constant 0 : index
    %12 = vector.load %arg5[%c0_9, %c0_10] : memref<1x8xf32, #tpu.memory_space<vmem>>, vector<1x8xf32>
    %13 = vector.broadcast %12 : vector<1x8xf32> to vector<8x8xf32>
    %14 = arith.addf %11, %13 : vector<8x8xf32>
    %15 = arith.negf %14 : vector<8x8xf32>
    %16 = math.exp %15 : vector<8x8xf32>
    %cst_11 = arith.constant 1.000000e+00 : f32
    %17 = vector.broadcast %cst_11 : f32 to vector<8x8xf32>
    %18 = arith.addf %17, %16 : vector<8x8xf32>
    %19 = arith.divf %17, %18 : vector<8x8xf32>
    %c0_12 = arith.constant 0 : index
    %c0_13 = arith.constant 0 : index
    %20 = vector.load %arg6[%c0_12, %c0_13] : memref<8x8xf32, #tpu.memory_space<vmem>>, vector<8x8xf32>
    tpu.vector_store %arg6[%c0_12, %c0_13], %19 {strides = array<i32>} : memref<8x8xf32, #tpu.memory_space<vmem>>, vector<8x8xf32>,
    return
  }
  func.func @transform_0(%arg0: i32) -> (i32, i32) {
    %c0_i32 = arith.constant 0 : i32
    %c0_i32_0 = arith.constant 0 : i32
    return %arg0, %c0_i32 : i32, i32
  }
  func.func @transform_1(%arg0: i32) -> (i32, i32) {
    %c0_i32 = arith.constant 0 : i32
    %c0_i32_0 = arith.constant 0 : i32
    %c0_i32_1 = arith.constant 0 : i32
    return %c0_i32, %c0_i32_0 : i32, i32
  }
  func.func @transform_2(%arg0: i32) -> (i32, i32) {
    %c0_i32 = arith.constant 0 : i32
    %c0_i32_0 = arith.constant 0 : i32
    %c0_i32_1 = arith.constant 0 : i32
    return %c0_i32, %c0_i32_0 : i32, i32
  }
  func.func @transform_3(%arg0: i32) -> (i32, i32) {
    %c0_i32 = arith.constant 0 : i32
    %c0_i32_0 = arith.constant 0 : i32
    %c0_i32_1 = arith.constant 0 : i32
    return %c0_i32, %c0_i32_0 : i32, i32
  }
  func.func @transform_4(%arg0: i32) -> (i32, i32) {
    %c0_i32 = arith.constant 0 : i32
    %c0_i32_0 = arith.constant 0 : i32
    %c0_i32_1 = arith.constant 0 : i32
    return %c0_i32, %c0_i32_0 : i32, i32
  }
  func.func @transform_5(%arg0: i32) -> (i32, i32) {
    %c0_i32 = arith.constant 0 : i32
    %c0_i32_0 = arith.constant 0 : i32
    return %arg0, %c0_i32 : i32, i32
  }
}

</mosaic_0001>

<llo_original>
// kernel: tpu_custom_call.1
$region0: #{tpu_custom_call.1}
  #allocation0 [shape = 'u32[]', space=smem, size = 0x4, offset = 0x4, fixed_abs, tag = 'smem constant byte address 0x4 - core index']
  #allocation1 [shape = 'u32[144,128]{1,0:T(1,128)}', space=vmem, size = 0x12000, scoped, tag = 'internal scratch']
  %s0 = inlined_call_operand.vmem [shape: f32[8,64], index: 0, kind: input, shape index: {}]
  %s1 = inlined_call_operand.vmem [shape: bf16[64,32], index: 1, kind: input, shape index: {}]
  %s2 = inlined_call_operand.vmem [shape: f32[1,32], index: 2, kind: input, shape index: {}]
  %s3 = inlined_call_operand.vmem [shape: bf16[32,8], index: 3, kind: input, shape index: {}]
  %s4 = inlined_call_operand.vmem [shape: f32[1,8], index: 4, kind: input, shape index: {}]
  %s5 = inlined_call_operand.hbm [shape: f32[8,8], index: 5, kind: output, shape index: {}]
  %s6 = sld [smem:[#allocation0]]
  $region30: #{tpu_custom_call.1} parent=0
    _
  %s8 = ssub.s32 1, %s6
  %s9 = scalar_select 0, %s8, %s6
  $region1: #{tpu_custom_call.1} parent=0
    #allocation2 [shape = 'u8[4096]{0}', space=vmem, size = 0x1000, scoped, tag = 'output window, operand 0, single buffered']
    #allocation3 [shape = 's32[1]{0}', space=sflag, size = 0x4, scoped, tag = 'scoped memory for tpu_custom_call.1']
    %10 = vsyncpa [#allocation3], 0
    // Predicated region
    $region2: #{tpu_custom_call.1} parent=1 // pred_check
      _
    $region3: #{tpu_custom_call.1} parent=1 // pred_check_branch
      %12 = sbr.rel (0) target = $region5
    $region4: #{tpu_custom_call.1} parent=1 // pred_region
      _
    $region5: #{tpu_custom_call.1} parent=1 // pred_fallthru
      _
    // Predicated region
    $region6: #{tpu_custom_call.1} parent=1 // pred_check
      _
    $region7: #{tpu_custom_call.1} parent=1 // pred_check_branch
      %14 = sbr.rel (0) target = $region9
    $region8: #{tpu_custom_call.1} parent=1 // pred_region
      _
    $region9: #{tpu_custom_call.1} parent=1 // pred_fallthru
      _
    // Predicated region
    $region10: #{tpu_custom_call.1} parent=1 // pred_check
      _
    $region11: #{tpu_custom_call.1} parent=1 // pred_check_branch
      %16 = sbr.rel (0) target = $region13
    $region12: #{tpu_custom_call.1} parent=1 // pred_region
      _
    $region13: #{tpu_custom_call.1} parent=1 // pred_fallthru
      _
    // Predicated region
    $region14: #{tpu_custom_call.1} parent=1 // pred_check
      _
    $region15: #{tpu_custom_call.1} parent=1 // pred_check_branch
      %18 = sbr.rel (0) target = $region17
    $region16: #{tpu_custom_call.1} parent=1 // pred_region
      _
    $region17: #{tpu_custom_call.1} parent=1 // pred_fallthru
      _
    // Predicated region
    $region18: #{tpu_custom_call.1} parent=1 // pred_check
      _
    $region19: #{tpu_custom_call.1} parent=1 // pred_check_branch
      %20 = sbr.rel (0) target = $region21
    $region20: #{tpu_custom_call.1} parent=1 // pred_region
      _
    $region21: #{tpu_custom_call.1} parent=1 // pred_fallthru
      _
    %v22 = vld [vmem:[%s0] sm:$0xff]
    %v23 = vpack.c.bf16 %v22, %v22
    %v24 = vld [vmem:[%s1] sm:$0xf]
    %v25 = vld [vmem:[%s1 + $0x4] sm:$0xf]
    %v26 = vld [vmem:[%s1 + $0x8] sm:$0xf]
    %v27 = vld [vmem:[%s1 + $0xc] sm:$0xf]
    %v28 = vld [vmem:[%s1 + $0x10] sm:$0xf]
    %v29 = vld [vmem:[%s1 + $0x14] sm:$0xf]
    %v30 = vld [vmem:[%s1 + $0x18] sm:$0xf]
    %v31 = vld [vmem:[%s1 + $0x1c] sm:$0xf]
    %v32 = vld [vmem:[%s2] sm:$0x1]
    %v34 = vlaneseq
    %v35 = vshrl.u32 %v34, 7
    %v36 = vsub.s32 0, %v35
    %v37 = vrot.slane %v32, %v36
    %v47 = vunpack.c.l.b16 %v24
    %v48 = vunpack.c.l.b16 %v25
    %v49 = vunpack.c.l.b16 %v26
    %v50 = vunpack.c.l.b16 %v27
    %v51 = vunpack.c.l.b16 %v28
    %v52 = vunpack.c.l.b16 %v29
    %v53 = vunpack.c.l.b16 %v30
    %v54 = vunpack.c.l.b16 %v31
    %v55 = vpack.c.b16 %v48, %v47
    %v56 = vpack.c.b16 %v50, %v49
    %v57 = vpack.c.b16 %v52, %v51
    %v58 = vpack.c.b16 %v54, %v53
    %vm63 = vcmask 523264
    %v65 = vsel %vm63, %v23, 0
    %67 = vmatprep.subr.bf16.mxu0 0
    %68 = vmatpush1.bf16.msra.mxu0 0
    %69 = vmatprep.subr.bf16.mxu0 0
    %70 = vmatpush1.bf16.msra.mxu0 0
    %71 = vmatprep.subr.bf16.mxu0 0
    %72 = vmatpush1.bf16.msra.mxu0 0
    %73 = vmatprep.subr.bf16.mxu0 0
    %74 = vmatpush1.bf16.msra.mxu0 0
    %75 = vmatprep.subr.bf16.mxu0 0
    %76 = vmatpush1.bf16.msra.mxu0 %v58
    %77 = vmatprep.subr.bf16.mxu0 0
    %78 = vmatpush1.bf16.msra.mxu0 %v57
    %79 = vmatprep.subr.bf16.mxu0 0
    %80 = vmatpush1.bf16.msra.mxu0 %v56
    %81 = vmatprep.subr.bf16.mxu0 0
    %82 = vmatpush1.bf16.msra.mxu0 %v55
    %83 = vmatprep.subr.bf16.mxu0 0
    %84 = vmatpush2.bf16.msra.mxu0 0
    %85 = vmatprep.subr.bf16.mxu0 0
    %86 = vmatpush2.bf16.msra.mxu0 0
    %87 = vmatprep.subr.bf16.mxu0 0
    %88 = vmatpush2.bf16.msra.mxu0 0
    %89 = vmatprep.subr.bf16.mxu0 0
    %90 = vmatpush2.bf16.msra.mxu0 0
    %91 = vmatprep.subr.bf16.mxu0 0
    %92 = vmatpush2.bf16.msra.mxu0 0
    %93 = vmatprep.subr.bf16.mxu0 0
    %94 = vmatpush2.bf16.msra.mxu0 0
    %95 = vmatprep.subr.bf16.mxu0 0
    %96 = vmatpush2.bf16.msra.mxu0 0
    %97 = vmatprep.subr.bf16.mxu0 0
    %98 = vmatpush2.bf16.msra.mxu0 0
    %99 = vmatprep.mubr.bf16.mxu0 0
    %100 = vmatmul.mubr.bf16.gmra.mxu0 %v65
    %v101 = vpop.f32.mrf.mxu0
    %v102 = vadd.f32 %v37, %v101
    %v103 = vpop.f32.mrf.mxu0
    %v104 = vpop.f32.mrf.mxu0
    %v105 = vpop.f32.mrf.mxu0
    %106 = vdwg.mxu0
    %v107 = vmax.f32 %v102, 0.0
    %v108 = vpack.c.bf16 %v107, %v107
    %v109 = vld [vmem:[%s3] sm:$0xf]
    %v110 = vld [vmem:[%s3 + $0x4] sm:$0xf]
    %v111 = vld [vmem:[%s3 + $0x8] sm:$0xf]
    %v112 = vld [vmem:[%s3 + $0xc] sm:$0xf]
    %v113 = vld [vmem:[%s4] sm:$0x1]
    %v115 = vlaneseq
    %v116 = vshrl.u32 %v115, 7
    %v117 = vsub.s32 0, %v116
    %v118 = vrot.slane %v113, %v117
    %v124 = vunpack.c.l.b16 %v109
    %v125 = vunpack.c.l.b16 %v110
    %v126 = vunpack.c.l.b16 %v111
    %v127 = vunpack.c.l.b16 %v112
    %v128 = vpack.c.b16 %v125, %v124
    %v129 = vpack.c.b16 %v127, %v126
    %vm132 = vcmask 261120
    %v134 = vsel %vm132, %v108, 0
    %136 = vmatprep.subr.bf16.mxu0 0
    %137 = vmatpush1.bf16.msra.mxu0 0
    %138 = vmatprep.subr.bf16.mxu0 0
    %139 = vmatpush1.bf16.msra.mxu0 0
    %140 = vmatprep.subr.bf16.mxu0 0
    %141 = vmatpush1.bf16.msra.mxu0 0
    %142 = vmatprep.subr.bf16.mxu0 0
    %143 = vmatpush1.bf16.msra.mxu0 0
    %144 = vmatprep.subr.bf16.mxu0 0
    %145 = vmatpush1.bf16.msra.mxu0 0
    %146 = vmatprep.subr.bf16.mxu0 0
    %147 = vmatpush1.bf16.msra.mxu0 0
    %148 = vmatprep.subr.bf16.mxu0 0
    %149 = vmatpush1.bf16.msra.mxu0 %v129
    %150 = vmatprep.subr.bf16.mxu0 0
    %151 = vmatpush1.bf16.msra.mxu0 %v128
    %152 = vmatprep.subr.bf16.mxu0 0
    %153 = vmatpush2.bf16.msra.mxu0 0
    %154 = vmatprep.subr.bf16.mxu0 0
    %155 = vmatpush2.bf16.msra.mxu0 0
    %156 = vmatprep.subr.bf16.mxu0 0
    %157 = vmatpush2.bf16.msra.mxu0 0
    %158 = vmatprep.subr.bf16.mxu0 0
    %159 = vmatpush2.bf16.msra.mxu0 0
    %160 = vmatprep.subr.bf16.mxu0 0
    %161 = vmatpush2.bf16.msra.mxu0 0
    %162 = vmatprep.subr.bf16.mxu0 0
    %163 = vmatpush2.bf16.msra.mxu0 0
    %164 = vmatprep.subr.bf16.mxu0 0
    %165 = vmatpush2.bf16.msra.mxu0 0
    %166 = vmatprep.subr.bf16.mxu0 0
    %167 = vmatpush2.bf16.msra.mxu0 0
    %168 = vmatprep.mubr.bf16.mxu0 0
    %169 = vmatmul.mubr.bf16.gmra.mxu0 %v134
    %v170 = vpop.f32.mrf.mxu0
    %v171 = vadd.f32 %v118, %v170
    %v172 = vpop.f32.mrf.mxu0
    %v173 = vpop.f32.mrf.mxu0
    %v174 = vpop.f32.mrf.mxu0
    %175 = vdwg.mxu0
    %v176 = vxor.u32 %v171, 2147483648
    %v177 = vmul.f32 %v176, 1.442695
    %v178 = vpow.pop %v177
    %v179 = vadd.f32 %v178, 1.0
    %v180 = vrcp.pop %v179
    %v181 = vmul.f32 1.0, %v180
    %vm182 = vcmask 64512
    %183 = vst.msk [vmem:[#allocation2] sm:$0xff] %vm182, %v181
    // Predicated region
    $region22: #{tpu_custom_call.1} parent=1 // pred_check
      _
    $region23: #{tpu_custom_call.1} parent=1 // pred_check_branch
      %185 = sbr.rel (0) target = $region25
    $region24: #{tpu_custom_call.1} parent=1 // pred_region
      %s187 = ssub.s32 128, 128
      %188 = vsyncadd [#allocation3], %s187
      %s190 = sshll.u32 [#allocation2], 4
      %s191 = int_to_ptr.vmem [resolvable:$true] %s190
      %193 = dma.vmem_to_hbm [thread:$0]  %s191, 128, %s5, [#allocation3]
    $region25: #{tpu_custom_call.1} parent=1 // pred_fallthru
      _
    // Predicated region
    $region26: #{tpu_custom_call.1} parent=1 // pred_check
      _
    $region27: #{tpu_custom_call.1} parent=1 // pred_check_branch
      %195 = sbr.rel (0) target = $region29
    $region28: #{tpu_custom_call.1} parent=1 // pred_region
      %196 = dma.done [#allocation3], 128
    $region29: #{tpu_custom_call.1} parent=1 // pred_fallthru
      _
    %197 = vsyncpa [#allocation3], 1

</llo_original>
